<compile_context>
chip_gen: v7x
topology: tpu7x:2x2x1
jax: 0.10.0
libtpu: 0.0.40
codegen_flags: <defaults>
</compile_context>

<pallas_src>
import functools

import jax
import jax.numpy as jnp
from jax import lax
from jax.experimental import pallas as pl
from jax.experimental.pallas import tpu as pltpu


def _gp_rbf_kernel(x_ref, expand_ref, grid_ref, out_ref, *, neg_half_inv_ls2):
    # x_ref:      (TB, D)    input rows, D on lanes
    # expand_ref: (D, D*G)   0/1 expansion matrix, E[d, d*G + g] = 1
    # grid_ref:   (1, D*G)   per-feature tiled grid, grid_t[0, d*G + g] = grid[g]
    # out_ref:    (TB, D*G)  lane-dense RBF features
    x_exp = jnp.dot(
        x_ref[...],
        expand_ref[...],
        preferred_element_type=jnp.float32,
        precision=lax.Precision.HIGHEST,   # exact f32 broadcast-by-matmul
    )                                      # (TB, D*G) on the MXU
    dist = x_exp - grid_ref[...]           # sublane broadcast of (1, D*G)
    out_ref[...] = jnp.exp((dist * dist) * neg_half_inv_ls2).astype(out_ref.dtype)


def _round_up(v, m):
    return ((v + m - 1) // m) * m


def _choose_row_tile(B, D, DG, out_itemsize, vmem_budget_bytes):
    """Pick a sublane-aligned row tile that (a) fits the VMEM budget
    double-buffered and (b) yields >= 8 pipelined blocks once B >= 64."""
    # Bytes per row, double-buffered input (f32) + output.
    per_row = 2 * (4 * D + out_itemsize * DG)
    cap = max(8, ((vmem_budget_bytes // per_row) // 8) * 8)
    if B <= 64:
        return B                      # tiny problem: one full-array block
    tb = _round_up(pl.cdiv(B, 8), 8)  # target ~8 blocks
    return min(tb, cap)


def gaussian_process_forward(x, grid, length_scale=1.0, *,
                             row_tile=None, out_dtype=jnp.float32):
    """x: (B, D) float32, grid: (G,) float32 -> (B, D, G) out_dtype."""
    B, D = x.shape
    G = grid.shape[0]
    DG = D * G

    x = x.astype(jnp.float32)
    grid = grid.astype(jnp.float32)
    out_itemsize = jnp.dtype(out_dtype).itemsize

    # Small constants built once in the wrapper (D x D*G = 32 KiB here).
    expand = jnp.repeat(jnp.eye(D, dtype=jnp.float32), G, axis=1)   # (D, D*G)
    grid_t = jnp.tile(grid, D).reshape(1, DG)                       # (1, D*G)

    # --- Row tiling: multiple pipelined blocks, sized for VMEM ------------
    # Conservative budget fits v5e's 16 MiB default scoped VMEM; v6e/v7x have
    # more headroom but the same tile stays safely inside their limits.
    vmem_budget = 12 * 1024 * 1024
    if row_tile is None:
        tb = _choose_row_tile(B, D, DG, out_itemsize, vmem_budget)
    else:
        tb = min(max(8, (row_tile // 8) * 8), B) if B > 8 else B
    tb = min(tb, B) if B <= 64 else tb

    n_blocks = pl.cdiv(B, tb)
    # Even block count helps v7x shard the parallel axis across both TCs.
    if n_blocks > 1 and n_blocks % 2 == 1:
        n_blocks += 1
    B_pad = n_blocks * tb

    # Pad rows up front (zeros -> finite exp values) so every block uses
    # full-size DMAs and unmasked wide stores; padded rows are sliced off.
    if B_pad != B:
        x = jnp.pad(x, ((0, B_pad - B), (0, 0)))

    neg_half_inv_ls2 = -0.5 / float(length_scale) ** 2

    # Advisory only; roughly account for the HIGHEST multi-pass matmul (~3x).
    cost = pl.CostEstimate(
        flops=3 * 2 * B_pad * D * DG + 3 * B_pad * DG,
        transcendentals=B_pad * DG,
        bytes_accessed=4 * (B_pad * D + D * DG + DG) + out_itemsize * B_pad * DG,
    )

    out_flat = pl.pallas_call(
        functools.partial(_gp_rbf_kernel, neg_half_inv_ls2=neg_half_inv_ls2),
        out_shape=jax.ShapeDtypeStruct((B_pad, DG), out_dtype),
        grid=(n_blocks,),
        in_specs=[
            pl.BlockSpec((tb, D), lambda i: (i, 0)),
            pl.BlockSpec((D, DG), lambda i: (0, 0)),
            pl.BlockSpec((1, DG), lambda i: (0, 0)),
        ],
        out_specs=pl.BlockSpec((tb, DG), lambda i: (i, 0)),
        compiler_params=pltpu.CompilerParams(
            dimension_semantics=("parallel",),
        ),
        cost_estimate=cost,
    )(x, expand, grid_t)

    # Drop padded rows, then contiguous reshape: [b, d*G + g] -> [b, d, g].
    if B_pad != B:
        out_flat = out_flat[:B]
    return out_flat.reshape(B, D, G)
    # TODO(synk): if a profile still shows exposed output writeback, deepen
    # output buffering via out_specs pipeline_mode=pl.Buffered(3).


def gaussian_process_ref(x, grid, length_scale=1.0):
    # Pure-JAX reference mirroring the PyTorch module (for a (B, D) input).
    dist = x[..., None] - grid            # (B, D, G)
    return jnp.exp(-0.5 * (dist / length_scale) ** 2)


if __name__ == "__main__":
    # Deterministic parameters per __init__: grid_min=-2, grid_max=2,
    # num_grids=8, length_scale=1.
    grid_min, grid_max, num_grids, length_scale = -2.0, 2.0, 8, 1.0
    g = jnp.linspace(grid_min, grid_max, num_grids, dtype=jnp.float32)

    key = jax.random.PRNGKey(0)

    # Small example consistent with the forward: batch=2, in_features=32.
    x_small = jax.random.normal(key, (2, 32), dtype=jnp.float32)
    out_small = jax.block_until_ready(
        gaussian_process_forward(x_small, g, length_scale))
    ref_small = gaussian_process_ref(x_small, g, length_scale)
    assert out_small.shape == (2, 32, num_grids)
    assert jnp.allclose(out_small, ref_small, atol=1e-5, rtol=1e-5)

    # Exercise the multi-block pipelined path with padding (B=200 -> tb=64,
    # 4 blocks, padded to 256 rows).
    x_big = jax.random.normal(jax.random.PRNGKey(1), (200, 32), dtype=jnp.float32)
    out_big = jax.block_until_ready(
        gaussian_process_forward(x_big, g, length_scale, row_tile=64))
    ref_big = gaussian_process_ref(x_big, g, length_scale)
    assert out_big.shape == (200, 32, num_grids)
    assert jnp.allclose(out_big, ref_big, atol=1e-5, rtol=1e-5)

    # Auto-tiling path (>= 8 blocks) plus the bf16 output option.
    x_auto = jax.random.normal(jax.random.PRNGKey(2), (1000, 32), dtype=jnp.float32)
    out_auto = jax.block_until_ready(
        gaussian_process_forward(x_auto, g, length_scale))
    ref_auto = gaussian_process_ref(x_auto, g, length_scale)
    assert out_auto.shape == (1000, 32, num_grids)
    assert jnp.allclose(out_auto, ref_auto, atol=1e-5, rtol=1e-5)

    out_bf16 = jax.block_until_ready(
        gaussian_process_forward(x_auto, g, length_scale, out_dtype=jnp.bfloat16))
    assert out_bf16.dtype == jnp.bfloat16
    assert jnp.allclose(out_bf16.astype(jnp.float32), ref_auto, atol=2e-2, rtol=2e-2)

    print("KERNEL_OK")
</pallas_src>

<mosaic_0001>
module attributes {stable_mosaic.version = 11 : i64} {
  func.func @_gp_rbf_kernel(%arg0: i32, %arg1: memref<2x32xf32, #tpu.memory_space<vmem>>, %arg2: memref<32x256xf32, #tpu.memory_space<vmem>>, %arg3: memref<1x256xf32, #tpu.memory_space<vmem>>, %arg4: memref<2x256xf32, #tpu.memory_space<vmem>>) attributes {dimension_semantics = [#tpu.dimension_semantics<parallel>], iteration_bounds = array<i64: 1>, scalar_prefetch = 0 : i64, scratch_operands = 0 : i64, tpu.core_type = #tpu.core_type<tc>, window_params = [{transform_indices = @transform_0, window_bounds = array<i64: 2, 32>}, {pipeline_mode = #tpu.pipeline_mode<synchronous>, transform_indices = @transform_1, window_bounds = array<i64: 32, 256>}, {pipeline_mode = #tpu.pipeline_mode<synchronous>, transform_indices = @transform_2, window_bounds = array<i64: 1, 256>}, {transform_indices = @transform_3, window_bounds = array<i64: 2, 256>}]} {
    %c0 = arith.constant 0 : index
    %c0_0 = arith.constant 0 : index
    %0 = vector.load %arg1[%c0, %c0_0] : memref<2x32xf32, #tpu.memory_space<vmem>>, vector<2x32xf32>
    %c0_1 = arith.constant 0 : index
    %c0_2 = arith.constant 0 : index
    %1 = vector.load %arg2[%c0_1, %c0_2] : memref<32x256xf32, #tpu.memory_space<vmem>>, vector<32x256xf32>
    %cst = arith.constant dense<0.000000e+00> : vector<2x256xf32>
    %2 = tpu.matmul %0, %1, %cst {dimension_numbers = #tpu.dot_dimension_numbers<[1], [0], [0], [1], [0, 0, 1, 1], [], []>, precision = #tpu.contract_precision<fp32>} : vector<2x32xf32>, vector<32x256xf32>, vector<2x256xf32> -> vector<2x256xf32>
    %c0_3 = arith.constant 0 : index
    %c0_4 = arith.constant 0 : index
    %3 = vector.load %arg3[%c0_3, %c0_4] : memref<1x256xf32, #tpu.memory_space<vmem>>, vector<1x256xf32>
    %4 = vector.broadcast %3 : vector<1x256xf32> to vector<2x256xf32>
    %5 = arith.subf %2, %4 : vector<2x256xf32>
    %6 = arith.mulf %5, %5 : vector<2x256xf32>
    %cst_5 = arith.constant -5.000000e-01 : f32
    %7 = vector.broadcast %cst_5 : f32 to vector<2x256xf32>
    %8 = arith.mulf %6, %7 : vector<2x256xf32>
    %9 = math.exp %8 : vector<2x256xf32>
    %c0_6 = arith.constant 0 : index
    %c0_7 = arith.constant 0 : index
    %10 = vector.load %arg4[%c0_6, %c0_7] : memref<2x256xf32, #tpu.memory_space<vmem>>, vector<2x256xf32>
    tpu.vector_store %arg4[%c0_6, %c0_7], %9 {strides = array<i32>} : memref<2x256xf32, #tpu.memory_space<vmem>>, vector<2x256xf32>,
    return
  }
  func.func @transform_0(%arg0: i32) -> (i32, i32) {
    %c0_i32 = arith.constant 0 : i32
    %c0_i32_0 = arith.constant 0 : i32
    return %arg0, %c0_i32 : i32, i32
  }
  func.func @transform_1(%arg0: i32) -> (i32, i32) {
    %c0_i32 = arith.constant 0 : i32
    %c0_i32_0 = arith.constant 0 : i32
    %c0_i32_1 = arith.constant 0 : i32
    return %c0_i32, %c0_i32_0 : i32, i32
  }
  func.func @transform_2(%arg0: i32) -> (i32, i32) {
    %c0_i32 = arith.constant 0 : i32
    %c0_i32_0 = arith.constant 0 : i32
    %c0_i32_1 = arith.constant 0 : i32
    return %c0_i32, %c0_i32_0 : i32, i32
  }
  func.func @transform_3(%arg0: i32) -> (i32, i32) {
    %c0_i32 = arith.constant 0 : i32
    %c0_i32_0 = arith.constant 0 : i32
    return %arg0, %c0_i32 : i32, i32
  }
}

</mosaic_0001>

<llo_original>
// kernel: tpu_custom_call.1
$region0: #{tpu_custom_call.1}
  #allocation0 [shape = 'u32[]', space=smem, size = 0x4, offset = 0x4, fixed_abs, tag = 'smem constant byte address 0x4 - core index']
  #allocation1 [shape = 'u32[144,128]{1,0:T(1,128)}', space=vmem, size = 0x12000, scoped, tag = 'internal scratch']
  %s0 = inlined_call_operand.hbm [shape: f32[2,32], index: 0, kind: input, shape index: {}]
  %s1 = inlined_call_operand.hbm [shape: f32[32,256], index: 1, kind: input, shape index: {}]
  %s2 = inlined_call_operand.vmem [shape: f32[1,256], index: 2, kind: input, shape index: {}]
  %s3 = inlined_call_operand.hbm [shape: f32[2,256], index: 3, kind: output, shape index: {}]
  %s4 = sld [smem:[#allocation0]]
  $region30: #{tpu_custom_call.1} parent=0
    _
  %s6 = ssub.s32 1, %s4
  %s7 = scalar_select 0, %s6, %s4
  $region1: #{tpu_custom_call.1} parent=0
    #allocation2 [shape = 'u8[1024]{0}', space=vmem, size = 0x400, scoped, tag = 'input window, operand 0, single buffered']
    #allocation3 [shape = 's32[1]{0}', space=sflag, size = 0x4, scoped, tag = 'scoped memory for tpu_custom_call.1']
    #allocation4 [shape = 's32[1]{0}', space=sflag, size = 0x4, scoped, tag = 'scoped memory for tpu_custom_call.1']
    #allocation5 [shape = 'u8[32768]{0}', space=vmem, size = 0x8000, scoped, tag = 'input window, operand 1, single buffered']
    #allocation6 [shape = 's32[1]{0}', space=sflag, size = 0x4, scoped, tag = 'scoped memory for tpu_custom_call.1']
    #allocation7 [shape = 'u8[2048]{0}', space=vmem, size = 0x800, scoped, tag = 'output window, operand 0, single buffered']
    %8 = vsyncpa [#allocation3], 0
    %9 = vsyncpa [#allocation6], 0
    %10 = vsyncpa [#allocation4], 0
    // Predicated region
    $region2: #{tpu_custom_call.1} parent=1 // pred_check
      _
    $region3: #{tpu_custom_call.1} parent=1 // pred_check_branch
      %12 = sbr.rel (0) target = $region5
    $region4: #{tpu_custom_call.1} parent=1 // pred_region
      %s14 = ssub.s32 32, 32
      %15 = vsyncadd [#allocation3], %s14
      %s17 = sshll.u32 [#allocation2], 4
      %s18 = int_to_ptr.vmem [resolvable:$true] %s17
      %20 = dma.hbm_to_vmem [thread:$0]  %s0, 32, %s18, [#allocation3]
    $region5: #{tpu_custom_call.1} parent=1 // pred_fallthru
      _
    // Predicated region
    $region6: #{tpu_custom_call.1} parent=1 // pred_check
      _
    $region7: #{tpu_custom_call.1} parent=1 // pred_check_branch
      %22 = sbr.rel (0) target = $region9
    $region8: #{tpu_custom_call.1} parent=1 // pred_region
      %s24 = ssub.s32 1024, 1024
      %25 = vsyncadd [#allocation6], %s24
      %s26 = sshll.u32 [#allocation5], 4
      %s27 = int_to_ptr.vmem [resolvable:$true] %s26
      %32 = dma.hbm_to_vmem [thread:$0]  %s1, 1024, %s27, [#allocation6], 256, 256, 16
    $region9: #{tpu_custom_call.1} parent=1 // pred_fallthru
      _
    // Predicated region
    $region10: #{tpu_custom_call.1} parent=1 // pred_check
      _
    $region11: #{tpu_custom_call.1} parent=1 // pred_check_branch
      %34 = sbr.rel (0) target = $region13
    $region12: #{tpu_custom_call.1} parent=1 // pred_region
      _
    $region13: #{tpu_custom_call.1} parent=1 // pred_fallthru
      _
    // Predicated region
    $region14: #{tpu_custom_call.1} parent=1 // pred_check
      _
    $region15: #{tpu_custom_call.1} parent=1 // pred_check_branch
      %36 = sbr.rel (0) target = $region17
    $region16: #{tpu_custom_call.1} parent=1 // pred_region
      %37 = dma.done [#allocation3], 32
    $region17: #{tpu_custom_call.1} parent=1 // pred_fallthru
      _
    // Predicated region
    $region18: #{tpu_custom_call.1} parent=1 // pred_check
      _
    $region19: #{tpu_custom_call.1} parent=1 // pred_check_branch
      %39 = sbr.rel (0) target = $region21
    $region20: #{tpu_custom_call.1} parent=1 // pred_region
      %40 = dma.done [#allocation6], 1024
    $region21: #{tpu_custom_call.1} parent=1 // pred_fallthru
      _
    %v41 = vld [vmem:[#allocation2] sm:$0x3]
    %v42 = vld [vmem:[#allocation5] sm:$0xff]
    %v43 = vld [vmem:[#allocation5 + $0x8] sm:$0xff]
    %v44 = vld [vmem:[#allocation5 + $0x10] sm:$0xff]
    %v45 = vld [vmem:[#allocation5 + $0x18] sm:$0xff]
    %v46 = vld [vmem:[#allocation5 + $0x20] sm:$0xff]
    %v47 = vld [vmem:[#allocation5 + $0x28] sm:$0xff]
    %v48 = vld [vmem:[#allocation5 + $0x30] sm:$0xff]
    %v49 = vld [vmem:[#allocation5 + $0x38] sm:$0xff]
    %vm50 = vcmask 261120
    %v52 = vsel %vm50, %v41, 0
    %v54 = vand.u32 %v43, 4294901760
    %55 = vmatprep.subr.mxu0 %v54
    %v56 = vand.u32 %v42, 4294901760
    %57 = vmatpush1.msra.mxu0 %v56
    %v58 = vand.u32 %v45, 4294901760
    %59 = vmatprep.subr.mxu0 %v58
    %v60 = vand.u32 %v44, 4294901760
    %61 = vmatpush1.msra.mxu0 %v60
    %v62 = vand.u32 %v47, 4294901760
    %63 = vmatprep.subr.mxu0 %v62
    %v64 = vand.u32 %v46, 4294901760
    %65 = vmatpush1.msra.mxu0 %v64
    %v66 = vand.u32 %v49, 4294901760
    %67 = vmatprep.subr.mxu0 %v66
    %v68 = vand.u32 %v48, 4294901760
    %69 = vmatpush1.msra.mxu0 %v68
    %70 = vmatprep.subr.mxu0 0.0
    %71 = vmatpush1.msra.mxu0 0.0
    %72 = vmatprep.subr.mxu0 0.0
    %73 = vmatpush1.msra.mxu0 0.0
    %74 = vmatprep.subr.mxu0 0.0
    %75 = vmatpush1.msra.mxu0 0.0
    %76 = vmatprep.subr.mxu0 0.0
    %77 = vmatpush1.msra.mxu0 0.0
    %78 = vmatprep.subr.mxu0 0.0
    %79 = vmatpush1.msra.mxu0 0.0
    %80 = vmatprep.subr.mxu0 0.0
    %81 = vmatpush1.msra.mxu0 0.0
    %82 = vmatprep.subr.mxu0 0.0
    %83 = vmatpush1.msra.mxu0 0.0
    %84 = vmatprep.subr.mxu0 0.0
    %85 = vmatpush1.msra.mxu0 0.0
    %86 = vmatprep.subr.mxu0 0.0
    %87 = vmatpush1.msra.mxu0 0.0
    %88 = vmatprep.subr.mxu0 0.0
    %89 = vmatpush1.msra.mxu0 0.0
    %90 = vmatprep.subr.mxu0 0.0
    %91 = vmatpush1.msra.mxu0 0.0
    %92 = vmatprep.subr.mxu0 0.0
    %93 = vmatpush1.msra.mxu0 0.0
    %94 = vmatprep.subr.mxu0 0.0
    %95 = vmatpush1.msra.mxu0 0.0
    %96 = vmatprep.subr.mxu0 0.0
    %97 = vmatpush1.msra.mxu0 0.0
    %98 = vmatprep.subr.mxu0 0.0
    %99 = vmatpush1.msra.mxu0 0.0
    %100 = vmatprep.subr.mxu0 0.0
    %101 = vmatpush1.msra.mxu0 0.0
    %102 = vmatprep.subr.mxu0 0.0
    %103 = vmatpush1.msra.mxu0 0.0
    %104 = vmatprep.subr.mxu0 0.0
    %105 = vmatpush1.msra.mxu0 0.0
    %106 = vmatprep.subr.mxu0 0.0
    %107 = vmatpush1.msra.mxu0 0.0
    %108 = vmatprep.subr.mxu0 0.0
    %109 = vmatpush1.msra.mxu0 0.0
    %110 = vmatprep.subr.mxu0 0.0
    %111 = vmatpush1.msra.mxu0 0.0
    %112 = vmatprep.subr.mxu0 0.0
    %113 = vmatpush1.msra.mxu0 0.0
    %114 = vmatprep.subr.mxu0 0.0
    %115 = vmatpush1.msra.mxu0 0.0
    %116 = vmatprep.subr.mxu0 0.0
    %117 = vmatpush1.msra.mxu0 0.0
    %118 = vmatprep.subr.mxu0 0.0
    %119 = vmatpush1.msra.mxu0 0.0
    %120 = vmatprep.subr.mxu0 0.0
    %121 = vmatpush1.msra.mxu0 0.0
    %122 = vmatprep.subr.mxu0 0.0
    %123 = vmatpush1.msra.mxu0 0.0
    %124 = vmatprep.subr.mxu0 0.0
    %125 = vmatpush1.msra.mxu0 0.0
    %126 = vmatprep.mubr.f32.mxu0 0.0
    %v127 = vand.u32 %v52, 4294901760
    %v128 = vsub.f32 %v52, %v127
    %v129 = vand.u32 %v128, 4294901760
    %v130 = vsub.f32 %v128, %v129
    %v131 = vand.u32 %v130, 4294901760
    %132 = vmatmul.mubr.f32.gmra.mrb[0].mxu0 %v131
    %v133 = vpop.f32.mrb[0].mxu0
    %v134 = vadd.f32 0.0, %v133
    %v135 = vpop.f32.mrb[0].mxu0
    %v136 = vadd.f32 0.0, %v135
    %137 = vdwg.mxu0
    %v138 = vand.u32 %v43, 4294901760
    %v139 = vsub.f32 %v43, %v138
    %v140 = vand.u32 %v139, 4294901760
    %v141 = vsub.f32 %v139, %v140
    %v142 = vand.u32 %v141, 4294901760
    %143 = vmatprep.subr.mxu0 %v142
    %v144 = vand.u32 %v42, 4294901760
    %v145 = vsub.f32 %v42, %v144
    %v146 = vand.u32 %v145, 4294901760
    %v147 = vsub.f32 %v145, %v146
    %v148 = vand.u32 %v147, 4294901760
    %149 = vmatpush1.msra.mxu0 %v148
    %v150 = vand.u32 %v45, 4294901760
    %v151 = vsub.f32 %v45, %v150
    %v152 = vand.u32 %v151, 4294901760
    %v153 = vsub.f32 %v151, %v152
    %v154 = vand.u32 %v153, 4294901760
    %155 = vmatprep.subr.mxu0 %v154
    %v156 = vand.u32 %v44, 4294901760
    %v157 = vsub.f32 %v44, %v156
    %v158 = vand.u32 %v157, 4294901760
    %v159 = vsub.f32 %v157, %v158
    %v160 = vand.u32 %v159, 4294901760
    %161 = vmatpush1.msra.mxu0 %v160
    %v162 = vand.u32 %v47, 4294901760
    %v163 = vsub.f32 %v47, %v162
    %v164 = vand.u32 %v163, 4294901760
    %v165 = vsub.f32 %v163, %v164
    %v166 = vand.u32 %v165, 4294901760
    %167 = vmatprep.subr.mxu0 %v166
    %v168 = vand.u32 %v46, 4294901760
    %v169 = vsub.f32 %v46, %v168
    %v170 = vand.u32 %v169, 4294901760
    %v171 = vsub.f32 %v169, %v170
    %v172 = vand.u32 %v171, 4294901760
    %173 = vmatpush1.msra.mxu0 %v172
    %v174 = vand.u32 %v49, 4294901760
    %v175 = vsub.f32 %v49, %v174
    %v176 = vand.u32 %v175, 4294901760
    %v177 = vsub.f32 %v175, %v176
    %v178 = vand.u32 %v177, 4294901760
    %179 = vmatprep.subr.mxu0 %v178
    %v180 = vand.u32 %v48, 4294901760
    %v181 = vsub.f32 %v48, %v180
    %v182 = vand.u32 %v181, 4294901760
    %v183 = vsub.f32 %v181, %v182
    %v184 = vand.u32 %v183, 4294901760
    %185 = vmatpush1.msra.mxu0 %v184
    %186 = vmatprep.subr.mxu0 0.0
    %187 = vmatpush1.msra.mxu0 0.0
    %188 = vmatprep.subr.mxu0 0.0
    %189 = vmatpush1.msra.mxu0 0.0
    %190 = vmatprep.subr.mxu0 0.0
    %191 = vmatpush1.msra.mxu0 0.0
    %192 = vmatprep.subr.mxu0 0.0
    %193 = vmatpush1.msra.mxu0 0.0
    %194 = vmatprep.subr.mxu0 0.0
    %195 = vmatpush1.msra.mxu0 0.0
    %196 = vmatprep.subr.mxu0 0.0
    %197 = vmatpush1.msra.mxu0 0.0
    %198 = vmatprep.subr.mxu0 0.0
    %199 = vmatpush1.msra.mxu0 0.0
    %200 = vmatprep.subr.mxu0 0.0
    %201 = vmatpush1.msra.mxu0 0.0
    %202 = vmatprep.subr.mxu0 0.0
    %203 = vmatpush1.msra.mxu0 0.0
    %204 = vmatprep.subr.mxu0 0.0
    %205 = vmatpush1.msra.mxu0 0.0
    %206 = vmatprep.subr.mxu0 0.0
    %207 = vmatpush1.msra.mxu0 0.0
    %208 = vmatprep.subr.mxu0 0.0
    %209 = vmatpush1.msra.mxu0 0.0
    %210 = vmatprep.subr.mxu0 0.0
    %211 = vmatpush1.msra.mxu0 0.0
    %212 = vmatprep.subr.mxu0 0.0
    %213 = vmatpush1.msra.mxu0 0.0
    %214 = vmatprep.subr.mxu0 0.0
    %215 = vmatpush1.msra.mxu0 0.0
    %216 = vmatprep.subr.mxu0 0.0
    %217 = vmatpush1.msra.mxu0 0.0
    %218 = vmatprep.subr.mxu0 0.0
    %219 = vmatpush1.msra.mxu0 0.0
    %220 = vmatprep.subr.mxu0 0.0
    %221 = vmatpush1.msra.mxu0 0.0
    %222 = vmatprep.subr.mxu0 0.0
    %223 = vmatpush1.msra.mxu0 0.0
    %224 = vmatprep.subr.mxu0 0.0
    %225 = vmatpush1.msra.mxu0 0.0
    %226 = vmatprep.subr.mxu0 0.0
    %227 = vmatpush1.msra.mxu0 0.0
    %228 = vmatprep.subr.mxu0 0.0
    %229 = vmatpush1.msra.mxu0 0.0
    %230 = vmatprep.subr.mxu0 0.0
    %231 = vmatpush1.msra.mxu0 0.0
    %232 = vmatprep.subr.mxu0 0.0
    %233 = vmatpush1.msra.mxu0 0.0
    %234 = vmatprep.subr.mxu0 0.0
    %235 = vmatpush1.msra.mxu0 0.0
    %236 = vmatprep.subr.mxu0 0.0
    %237 = vmatpush1.msra.mxu0 0.0
    %238 = vmatprep.subr.mxu0 0.0
    %239 = vmatpush1.msra.mxu0 0.0
    %240 = vmatprep.subr.mxu0 0.0
    %241 = vmatpush1.msra.mxu0 0.0
    %242 = vmatprep.mubr.f32.mxu0 0.0
    %v243 = vand.u32 %v52, 4294901760
    %244 = vmatmul.mubr.f32.gmra.mrb[0].mxu0 %v243
    %v245 = vpop.f32.mrb[0].mxu0
    %v246 = vadd.f32 %v134, %v245
    %v247 = vpop.f32.mrb[0].mxu0
    %v248 = vadd.f32 %v136, %v247
    %249 = vdwg.mxu0
    %v250 = vand.u32 %v43, 4294901760
    %v251 = vsub.f32 %v43, %v250
    %252 = vmatprep.subr.mxu0 %v251
    %v253 = vand.u32 %v42, 4294901760
    %v254 = vsub.f32 %v42, %v253
    %255 = vmatpush1.msra.mxu0 %v254
    %v256 = vand.u32 %v45, 4294901760
    %v257 = vsub.f32 %v45, %v256
    %258 = vmatprep.subr.mxu0 %v257
    %v259 = vand.u32 %v44, 4294901760
    %v260 = vsub.f32 %v44, %v259
    %261 = vmatpush1.msra.mxu0 %v260
    %v262 = vand.u32 %v47, 4294901760
    %v263 = vsub.f32 %v47, %v262
    %264 = vmatprep.subr.mxu0 %v263
    %v265 = vand.u32 %v46, 4294901760
    %v266 = vsub.f32 %v46, %v265
    %267 = vmatpush1.msra.mxu0 %v266
    %v268 = vand.u32 %v49, 4294901760
    %v269 = vsub.f32 %v49, %v268
    %270 = vmatprep.subr.mxu0 %v269
    %v271 = vand.u32 %v48, 4294901760
    %v272 = vsub.f32 %v48, %v271
    %273 = vmatpush1.msra.mxu0 %v272
    %274 = vmatprep.subr.mxu0 0.0
    %275 = vmatpush1.msra.mxu0 0.0
    %276 = vmatprep.subr.mxu0 0.0
    %277 = vmatpush1.msra.mxu0 0.0
    %278 = vmatprep.subr.mxu0 0.0
    %279 = vmatpush1.msra.mxu0 0.0
    %280 = vmatprep.subr.mxu0 0.0
    %281 = vmatpush1.msra.mxu0 0.0
    %282 = vmatprep.subr.mxu0 0.0
    %283 = vmatpush1.msra.mxu0 0.0
    %284 = vmatprep.subr.mxu0 0.0
    %285 = vmatpush1.msra.mxu0 0.0
    %286 = vmatprep.subr.mxu0 0.0
    %287 = vmatpush1.msra.mxu0 0.0
    %288 = vmatprep.subr.mxu0 0.0
    %289 = vmatpush1.msra.mxu0 0.0
    %290 = vmatprep.subr.mxu0 0.0
    %291 = vmatpush1.msra.mxu0 0.0
    %292 = vmatprep.subr.mxu0 0.0
    %293 = vmatpush1.msra.mxu0 0.0
    %294 = vmatprep.subr.mxu0 0.0
    %295 = vmatpush1.msra.mxu0 0.0
    %296 = vmatprep.subr.mxu0 0.0
    %297 = vmatpush1.msra.mxu0 0.0
    %298 = vmatprep.subr.mxu0 0.0
    %299 = vmatpush1.msra.mxu0 0.0
    %300 = vmatprep.subr.mxu0 0.0
    %301 = vmatpush1.msra.mxu0 0.0
    %302 = vmatprep.subr.mxu0 0.0
    %303 = vmatpush1.msra.mxu0 0.0
    %304 = vmatprep.subr.mxu0 0.0
    %305 = vmatpush1.msra.mxu0 0.0
    %306 = vmatprep.subr.mxu0 0.0
    %307 = vmatpush1.msra.mxu0 0.0
    %308 = vmatprep.subr.mxu0 0.0
    %309 = vmatpush1.msra.mxu0 0.0
    %310 = vmatprep.subr.mxu0 0.0
    %311 = vmatpush1.msra.mxu0 0.0
    %312 = vmatprep.subr.mxu0 0.0
    %313 = vmatpush1.msra.mxu0 0.0
    %314 = vmatprep.subr.mxu0 0.0
    %315 = vmatpush1.msra.mxu0 0.0
    %316 = vmatprep.subr.mxu0 0.0
    %317 = vmatpush1.msra.mxu0 0.0
    %318 = vmatprep.subr.mxu0 0.0
    %319 = vmatpush1.msra.mxu0 0.0
    %320 = vmatprep.subr.mxu0 0.0
    %321 = vmatpush1.msra.mxu0 0.0
    %322 = vmatprep.subr.mxu0 0.0
    %323 = vmatpush1.msra.mxu0 0.0
    %324 = vmatprep.subr.mxu0 0.0
    %325 = vmatpush1.msra.mxu0 0.0
    %326 = vmatprep.subr.mxu0 0.0
    %327 = vmatpush1.msra.mxu0 0.0
    %328 = vmatprep.subr.mxu0 0.0
    %329 = vmatpush1.msra.mxu0 0.0
    %330 = vmatprep.mubr.f32.mxu0 0.0
    %v331 = vand.u32 %v52, 4294901760
    %v332 = vsub.f32 %v52, %v331
    %333 = vmatmul.mubr.f32.gmra.mrb[0].mxu0 %v332
    %v334 = vpop.f32.mrb[0].mxu0
    %v335 = vadd.f32 %v246, %v334
    %v336 = vpop.f32.mrb[0].mxu0
    %v337 = vadd.f32 %v248, %v336
    %338 = vdwg.mxu0
    %v339 = vand.u32 %v43, 4294901760
    %340 = vmatprep.subr.mxu0 %v339
    %v341 = vand.u32 %v42, 4294901760
    %342 = vmatpush1.msra.mxu0 %v341
    %v343 = vand.u32 %v45, 4294901760
    %344 = vmatprep.subr.mxu0 %v343
    %v345 = vand.u32 %v44, 4294901760
    %346 = vmatpush1.msra.mxu0 %v345
    %v347 = vand.u32 %v47, 4294901760
    %348 = vmatprep.subr.mxu0 %v347
    %v349 = vand.u32 %v46, 4294901760
    %350 = vmatpush1.msra.mxu0 %v349
    %v351 = vand.u32 %v49, 4294901760
    %352 = vmatprep.subr.mxu0 %v351
    %v353 = vand.u32 %v48, 4294901760
    %354 = vmatpush1.msra.mxu0 %v353
    %355 = vmatprep.subr.mxu0 0.0
    %356 = vmatpush1.msra.mxu0 0.0
    %357 = vmatprep.subr.mxu0 0.0
    %358 = vmatpush1.msra.mxu0 0.0
    %359 = vmatprep.subr.mxu0 0.0
    %360 = vmatpush1.msra.mxu0 0.0
    %361 = vmatprep.subr.mxu0 0.0
    %362 = vmatpush1.msra.mxu0 0.0
    %363 = vmatprep.subr.mxu0 0.0
    %364 = vmatpush1.msra.mxu0 0.0
    %365 = vmatprep.subr.mxu0 0.0
    %366 = vmatpush1.msra.mxu0 0.0
    %367 = vmatprep.subr.mxu0 0.0
    %368 = vmatpush1.msra.mxu0 0.0
    %369 = vmatprep.subr.mxu0 0.0
    %370 = vmatpush1.msra.mxu0 0.0
    %371 = vmatprep.subr.mxu0 0.0
    %372 = vmatpush1.msra.mxu0 0.0
    %373 = vmatprep.subr.mxu0 0.0
    %374 = vmatpush1.msra.mxu0 0.0
    %375 = vmatprep.subr.mxu0 0.0
    %376 = vmatpush1.msra.mxu0 0.0
    %377 = vmatprep.subr.mxu0 0.0
    %378 = vmatpush1.msra.mxu0 0.0
    %379 = vmatprep.subr.mxu0 0.0
    %380 = vmatpush1.msra.mxu0 0.0
    %381 = vmatprep.subr.mxu0 0.0
    %382 = vmatpush1.msra.mxu0 0.0
    %383 = vmatprep.subr.mxu0 0.0
    %384 = vmatpush1.msra.mxu0 0.0
    %385 = vmatprep.subr.mxu0 0.0
    %386 = vmatpush1.msra.mxu0 0.0
    %387 = vmatprep.subr.mxu0 0.0
    %388 = vmatpush1.msra.mxu0 0.0
    %389 = vmatprep.subr.mxu0 0.0
    %390 = vmatpush1.msra.mxu0 0.0
    %391 = vmatprep.subr.mxu0 0.0
    %392 = vmatpush1.msra.mxu0 0.0
    %393 = vmatprep.subr.mxu0 0.0
    %394 = vmatpush1.msra.mxu0 0.0
    %395 = vmatprep.subr.mxu0 0.0
    %396 = vmatpush1.msra.mxu0 0.0
    %397 = vmatprep.subr.mxu0 0.0
    %398 = vmatpush1.msra.mxu0 0.0
    %399 = vmatprep.subr.mxu0 0.0
    %400 = vmatpush1.msra.mxu0 0.0
    %401 = vmatprep.subr.mxu0 0.0
    %402 = vmatpush1.msra.mxu0 0.0
    %403 = vmatprep.subr.mxu0 0.0
    %404 = vmatpush1.msra.mxu0 0.0
    %405 = vmatprep.subr.mxu0 0.0
    %406 = vmatpush1.msra.mxu0 0.0
    %407 = vmatprep.subr.mxu0 0.0
    %408 = vmatpush1.msra.mxu0 0.0
    %409 = vmatprep.subr.mxu0 0.0
    %410 = vmatpush1.msra.mxu0 0.0
    %411 = vmatprep.mubr.f32.mxu0 0.0
    %v412 = vand.u32 %v52, 4294901760
    %v413 = vsub.f32 %v52, %v412
    %v414 = vand.u32 %v413, 4294901760
    %415 = vmatmul.mubr.f32.gmra.mrb[0].mxu0 %v414
    %v416 = vpop.f32.mrb[0].mxu0
    %v417 = vadd.f32 %v335, %v416
    %v418 = vpop.f32.mrb[0].mxu0
    %v419 = vadd.f32 %v337, %v418
    %420 = vdwg.mxu0
    %v421 = vand.u32 %v43, 4294901760
    %v422 = vsub.f32 %v43, %v421
    %v423 = vand.u32 %v422, 4294901760
    %424 = vmatprep.subr.mxu0 %v423
    %v425 = vand.u32 %v42, 4294901760
    %v426 = vsub.f32 %v42, %v425
    %v427 = vand.u32 %v426, 4294901760
    %428 = vmatpush1.msra.mxu0 %v427
    %v429 = vand.u32 %v45, 4294901760
    %v430 = vsub.f32 %v45, %v429
    %v431 = vand.u32 %v430, 4294901760
    %432 = vmatprep.subr.mxu0 %v431
    %v433 = vand.u32 %v44, 4294901760
    %v434 = vsub.f32 %v44, %v433
    %v435 = vand.u32 %v434, 4294901760
    %436 = vmatpush1.msra.mxu0 %v435
    %v437 = vand.u32 %v47, 4294901760
    %v438 = vsub.f32 %v47, %v437
    %v439 = vand.u32 %v438, 4294901760
    %440 = vmatprep.subr.mxu0 %v439
    %v441 = vand.u32 %v46, 4294901760
    %v442 = vsub.f32 %v46, %v441
    %v443 = vand.u32 %v442, 4294901760
    %444 = vmatpush1.msra.mxu0 %v443
    %v445 = vand.u32 %v49, 4294901760
    %v446 = vsub.f32 %v49, %v445
    %v447 = vand.u32 %v446, 4294901760
    %448 = vmatprep.subr.mxu0 %v447
    %v449 = vand.u32 %v48, 4294901760
    %v450 = vsub.f32 %v48, %v449
    %v451 = vand.u32 %v450, 4294901760
    %452 = vmatpush1.msra.mxu0 %v451
    %453 = vmatprep.subr.mxu0 0.0
    %454 = vmatpush1.msra.mxu0 0.0
    %455 = vmatprep.subr.mxu0 0.0
    %456 = vmatpush1.msra.mxu0 0.0
    %457 = vmatprep.subr.mxu0 0.0
    %458 = vmatpush1.msra.mxu0 0.0
    %459 = vmatprep.subr.mxu0 0.0
    %460 = vmatpush1.msra.mxu0 0.0
    %461 = vmatprep.subr.mxu0 0.0
    %462 = vmatpush1.msra.mxu0 0.0
    %463 = vmatprep.subr.mxu0 0.0
    %464 = vmatpush1.msra.mxu0 0.0
    %465 = vmatprep.subr.mxu0 0.0
    %466 = vmatpush1.msra.mxu0 0.0
    %467 = vmatprep.subr.mxu0 0.0
    %468 = vmatpush1.msra.mxu0 0.0
    %469 = vmatprep.subr.mxu0 0.0
    %470 = vmatpush1.msra.mxu0 0.0
    %471 = vmatprep.subr.mxu0 0.0
    %472 = vmatpush1.msra.mxu0 0.0
    %473 = vmatprep.subr.mxu0 0.0
    %474 = vmatpush1.msra.mxu0 0.0
    %475 = vmatprep.subr.mxu0 0.0
    %476 = vmatpush1.msra.mxu0 0.0
    %477 = vmatprep.subr.mxu0 0.0
    %478 = vmatpush1.msra.mxu0 0.0
    %479 = vmatprep.subr.mxu0 0.0
    %480 = vmatpush1.msra.mxu0 0.0
    %481 = vmatprep.subr.mxu0 0.0
    %482 = vmatpush1.msra.mxu0 0.0
    %483 = vmatprep.subr.mxu0 0.0
    %484 = vmatpush1.msra.mxu0 0.0
    %485 = vmatprep.subr.mxu0 0.0
    %486 = vmatpush1.msra.mxu0 0.0
    %487 = vmatprep.subr.mxu0 0.0
    %488 = vmatpush1.msra.mxu0 0.0
    %489 = vmatprep.subr.mxu0 0.0
    %490 = vmatpush1.msra.mxu0 0.0
    %491 = vmatprep.subr.mxu0 0.0
    %492 = vmatpush1.msra.mxu0 0.0
    %493 = vmatprep.subr.mxu0 0.0
    %494 = vmatpush1.msra.mxu0 0.0
    %495 = vmatprep.subr.mxu0 0.0
    %496 = vmatpush1.msra.mxu0 0.0
    %497 = vmatprep.subr.mxu0 0.0
    %498 = vmatpush1.msra.mxu0 0.0
    %499 = vmatprep.subr.mxu0 0.0
    %500 = vmatpush1.msra.mxu0 0.0
    %501 = vmatprep.subr.mxu0 0.0
    %502 = vmatpush1.msra.mxu0 0.0
    %503 = vmatprep.subr.mxu0 0.0
    %504 = vmatpush1.msra.mxu0 0.0
    %505 = vmatprep.subr.mxu0 0.0
    %506 = vmatpush1.msra.mxu0 0.0
    %507 = vmatprep.subr.mxu0 0.0
    %508 = vmatpush1.msra.mxu0 0.0
    %509 = vmatprep.mubr.f32.mxu0 0.0
    %v510 = vand.u32 %v52, 4294901760
    %511 = vmatmul.mubr.f32.gmra.mrb[0].mxu0 %v510
    %v512 = vpop.f32.mrb[0].mxu0
    %v513 = vadd.f32 %v417, %v512
    %v514 = vpop.f32.mrb[0].mxu0
    %v515 = vadd.f32 %v419, %v514
    %516 = vdwg.mxu0
    %v517 = vand.u32 %v43, 4294901760
    %518 = vmatprep.subr.mxu0 %v517
    %v519 = vand.u32 %v42, 4294901760
    %520 = vmatpush1.msra.mxu0 %v519
    %v521 = vand.u32 %v45, 4294901760
    %522 = vmatprep.subr.mxu0 %v521
    %v523 = vand.u32 %v44, 4294901760
    %524 = vmatpush1.msra.mxu0 %v523
    %v525 = vand.u32 %v47, 4294901760
    %526 = vmatprep.subr.mxu0 %v525
    %v527 = vand.u32 %v46, 4294901760
    %528 = vmatpush1.msra.mxu0 %v527
    %v529 = vand.u32 %v49, 4294901760
    %530 = vmatprep.subr.mxu0 %v529
    %v531 = vand.u32 %v48, 4294901760
    %532 = vmatpush1.msra.mxu0 %v531
    %533 = vmatprep.subr.mxu0 0.0
    %534 = vmatpush1.msra.mxu0 0.0
    %535 = vmatprep.subr.mxu0 0.0
    %536 = vmatpush1.msra.mxu0 0.0
    %537 = vmatprep.subr.mxu0 0.0
    %538 = vmatpush1.msra.mxu0 0.0
    %539 = vmatprep.subr.mxu0 0.0
    %540 = vmatpush1.msra.mxu0 0.0
    %541 = vmatprep.subr.mxu0 0.0
    %542 = vmatpush1.msra.mxu0 0.0
    %543 = vmatprep.subr.mxu0 0.0
    %544 = vmatpush1.msra.mxu0 0.0
    %545 = vmatprep.subr.mxu0 0.0
    %546 = vmatpush1.msra.mxu0 0.0
    %547 = vmatprep.subr.mxu0 0.0
    %548 = vmatpush1.msra.mxu0 0.0
    %549 = vmatprep.subr.mxu0 0.0
    %550 = vmatpush1.msra.mxu0 0.0
    %551 = vmatprep.subr.mxu0 0.0
    %552 = vmatpush1.msra.mxu0 0.0
    %553 = vmatprep.subr.mxu0 0.0
    %554 = vmatpush1.msra.mxu0 0.0
    %555 = vmatprep.subr.mxu0 0.0
    %556 = vmatpush1.msra.mxu0 0.0
    %557 = vmatprep.subr.mxu0 0.0
    %558 = vmatpush1.msra.mxu0 0.0
    %559 = vmatprep.subr.mxu0 0.0
    %560 = vmatpush1.msra.mxu0 0.0
    %561 = vmatprep.subr.mxu0 0.0
    %562 = vmatpush1.msra.mxu0 0.0
    %563 = vmatprep.subr.mxu0 0.0
    %564 = vmatpush1.msra.mxu0 0.0
    %565 = vmatprep.subr.mxu0 0.0
    %566 = vmatpush1.msra.mxu0 0.0
    %567 = vmatprep.subr.mxu0 0.0
    %568 = vmatpush1.msra.mxu0 0.0
    %569 = vmatprep.subr.mxu0 0.0
    %570 = vmatpush1.msra.mxu0 0.0
    %571 = vmatprep.subr.mxu0 0.0
    %572 = vmatpush1.msra.mxu0 0.0
    %573 = vmatprep.subr.mxu0 0.0
    %574 = vmatpush1.msra.mxu0 0.0
    %575 = vmatprep.subr.mxu0 0.0
    %576 = vmatpush1.msra.mxu0 0.0
    %577 = vmatprep.subr.mxu0 0.0
    %578 = vmatpush1.msra.mxu0 0.0
    %579 = vmatprep.subr.mxu0 0.0
    %580 = vmatpush1.msra.mxu0 0.0
    %581 = vmatprep.subr.mxu0 0.0
    %582 = vmatpush1.msra.mxu0 0.0
    %583 = vmatprep.subr.mxu0 0.0
    %584 = vmatpush1.msra.mxu0 0.0
    %585 = vmatprep.subr.mxu0 0.0
    %586 = vmatpush1.msra.mxu0 0.0
    %587 = vmatprep.subr.mxu0 0.0
    %588 = vmatpush1.msra.mxu0 0.0
    %589 = vmatprep.mubr.f32.mxu0 0.0
    %v590 = vand.u32 %v52, 4294901760
    %591 = vmatmul.mubr.f32.gmra.mrb[0].mxu0 %v590
    %v592 = vpop.f32.mrb[0].mxu0
    %v593 = vadd.f32 %v513, %v592
    %v594 = vpop.f32.mrb[0].mxu0
    %v595 = vadd.f32 %v515, %v594
    %596 = vdwg.mxu0
    %v597 = vld [vmem:[%s2] sm:$0x3]
    %v599 = vlaneseq
    %v600 = vshrl.u32 %v599, 7
    %v601 = vsub.s32 0, %v600
    %v602 = vrot.slane %v597, %v601
    %v603 = vlaneseq
    %v604 = vshrl.u32 %v603, 7
    %v605 = vsub.s32 1, %v604
    %v606 = vrot.slane %v597, %v605
    %v609 = vsub.f32 %v593, %v602
    %v610 = vsub.f32 %v595, %v606
    %v611 = vmul.f32 %v609, %v609
    %v612 = vmul.f32 %v610, %v610
    %v613 = vmul.f32 %v611, -0.5
    %v614 = vmul.f32 %v612, -0.5
    %v615 = vmul.f32 %v613, 1.442695
    %v616 = vpow.pop %v615
    %v617 = vmul.f32 %v614, 1.442695
    %v618 = vpow.pop %v617
    %v621 = vcombine.low %v616, %v618
    %v623 = vunpack.c.l.s4 1983009808
    %v624 = vunpack.c.0.s8 %v623
    %v625 = vlaneseq
    %v626 = vshrl.u32 %v625, 7
    %v627 = vsub.s32 %v624, %v626
    %v628 = vrot.slane %v621, %v627
    %630 = vst [vmem:[#allocation7] sm:$0xf] %v628
    // Predicated region
    $region22: #{tpu_custom_call.1} parent=1 // pred_check
      _
    $region23: #{tpu_custom_call.1} parent=1 // pred_check_branch
      %632 = sbr.rel (0) target = $region25
    $region24: #{tpu_custom_call.1} parent=1 // pred_region
      %s634 = ssub.s32 64, 64
      %635 = vsyncadd [#allocation4], %s634
      %s637 = sshll.u32 [#allocation7], 4
      %s638 = int_to_ptr.vmem [resolvable:$true] %s637
      %640 = dma.vmem_to_hbm [thread:$0]  %s638, 64, %s3, [#allocation4]
    $region25: #{tpu_custom_call.1} parent=1 // pred_fallthru
      _
    // Predicated region
    $region26: #{tpu_custom_call.1} parent=1 // pred_check
      _
    $region27: #{tpu_custom_call.1} parent=1 // pred_check_branch
      %642 = sbr.rel (0) target = $region29
    $region28: #{tpu_custom_call.1} parent=1 // pred_region
      %643 = dma.done [#allocation4], 64
    $region29: #{tpu_custom_call.1} parent=1 // pred_fallthru
      _
    %644 = vsyncpa [#allocation3], 1
    %645 = vsyncpa [#allocation6], 1
    %646 = vsyncpa [#allocation4], 1

</llo_original>
